<compile_context>
chip_gen: v7x
topology: tpu7x:2x2x1
jax: 0.10.0
libtpu: 0.0.40
codegen_flags: <defaults>
</compile_context>

<pallas_src>
import jax
import jax.numpy as jnp
from jax.experimental import pallas as pl
from jax.experimental.pallas import tpu as pltpu


def _blur_kernel(x_ref, o_ref, t_ref):
    """Separable reflect-padded normalized 3x3 blur on a (H, W, C) block.

    x_ref, o_ref: (H, W, TC) channels-last blocks (C on lanes).
    t_ref:        (H, W, TC) f32 VMEM scratch for the horizontal pass.
    """
    H = x_ref.shape[0]
    W = x_ref.shape[1]
    x = x_ref[...].astype(jnp.float32)

    # ---- Horizontal [1, 2, 1] pass along W (sublane axis), reflect halo ----
    # interior columns 1 .. W-2   (1*a + 2*b + 1*c  ==  (a + c) + (b + b))
    t_ref[:, 1:W - 1, :] = (x[:, 0:W - 2, :] + x[:, 2:W, :]) + \
                           (x[:, 1:W - 1, :] + x[:, 1:W - 1, :])
    # reflected boundaries: x[-1] == x[1], x[W] == x[W-2]
    t_ref[:, 0:1, :] = 2.0 * (x[:, 0:1, :] + x[:, 1:2, :])
    t_ref[:, W - 1:W, :] = 2.0 * (x[:, W - 1:W, :] + x[:, W - 2:W - 1, :])

    t = t_ref[...]

    # ---- Vertical [1, 2, 1] pass along H (leading axis), reflect halo ----
    scale = 1.0 / 16.0
    y_int = (t[0:H - 2, :, :] + t[2:H, :, :]) + \
            (t[1:H - 1, :, :] + t[1:H - 1, :, :])
    o_ref[1:H - 1, :, :] = (y_int * scale).astype(o_ref.dtype)
    o_ref[0:1, :, :] = ((t[0:1, :, :] + t[1:2, :, :]) * (2.0 * scale)).astype(o_ref.dtype)
    o_ref[H - 1:H, :, :] = ((t[H - 1:H, :, :] + t[H - 2:H - 1, :, :])
                            * (2.0 * scale)).astype(o_ref.dtype)


def _pick_channel_tile(num_channels, H, W, itemsize):
    """Channel (lane) tile size: a multiple of 128 that divides num_channels
    and keeps one input block within a modest VMEM budget (so double-buffered
    in+out blocks plus the f32 scratch stay well under the scoped VMEM limit
    on v5e/v6e/v7x). Falls back to the full axis for small / odd counts."""
    if num_channels % 128 != 0:
        # Minor block dim must be a multiple of 128 or the full dim.
        return num_channels
    budget_bytes = 2 * 1024 * 1024  # per input block
    best = 128
    tc = 128
    while tc <= num_channels:
        if num_channels % tc == 0 and H * W * tc * itemsize <= budget_bytes:
            best = tc
        tc += 128
    return best


def blur(x):
    """Reflect-padded, normalized 3x3 ([1,2,1] x [1,2,1] / 16) depthwise blur.

    x: (B, C, H, W) -> (B, C, H, W). Matches the PyTorch Blur module
    (kornia filter2d, normalized=True, border_type='reflect').
    """
    B, C, H, W = x.shape
    BC = B * C

    # Channels-last layout plumbing: put B*C on the lane axis so kernel
    # loads/stores are lane-dense and tap shifts never cross lanes.
    xt = jnp.transpose(x.reshape(BC, H, W), (1, 2, 0))  # (H, W, BC)

    tc = _pick_channel_tile(BC, H, W, xt.dtype.itemsize)
    grid = (BC // tc,)

    out = pl.pallas_call(
        _blur_kernel,
        out_shape=jax.ShapeDtypeStruct((H, W, BC), x.dtype),
        grid_spec=pltpu.PrefetchScalarGridSpec(
            num_scalar_prefetch=0,
            grid=grid,
            in_specs=[pl.BlockSpec((H, W, tc), lambda i: (0, 0, i))],
            out_specs=pl.BlockSpec((H, W, tc), lambda i: (0, 0, i)),
            scratch_shapes=[pltpu.VMEM((H, W, tc), jnp.float32)],
        ),
        compiler_params=pltpu.CompilerParams(
            dimension_semantics=("parallel",),
            vmem_limit_bytes=32 * 1024 * 1024,
        ),
    )(xt)

    return jnp.transpose(out, (2, 0, 1)).reshape(B, C, H, W)


# Normalized 3x3 blur taps for the pure-JAX reference: outer([1,2,1],[1,2,1])/16
_FILT = [[1.0 / 16, 2.0 / 16, 1.0 / 16],
         [2.0 / 16, 4.0 / 16, 2.0 / 16],
         [1.0 / 16, 2.0 / 16, 1.0 / 16]]


def _blur_ref(x):
    """Pure-JAX reference: reflect-padded direct 9-tap depthwise blur."""
    B, C, H, W = x.shape
    xp = jnp.pad(x, ((0, 0), (0, 0), (1, 1), (1, 1)), mode="reflect")
    acc = jnp.zeros(x.shape, dtype=jnp.float32)
    for di in range(3):
        for dj in range(3):
            acc = acc + _FILT[di][dj] * xp[:, :, di:di + H, dj:dj + W].astype(jnp.float32)
    return acc.astype(x.dtype)


if __name__ == "__main__":
    key = jax.random.PRNGKey(0)

    # Small shape consistent with the module's forward.
    B, C, H, W = 2, 4, 16, 16
    x = jax.random.normal(key, (B, C, H, W), dtype=jnp.float32)
    y = jax.block_until_ready(blur(x))
    y_ref = _blur_ref(x)
    assert y.shape == (B, C, H, W)
    assert jnp.allclose(y, y_ref, atol=1e-5, rtol=1e-5), "mismatch vs reference (small)"

    # Larger channel count exercises the lane-tiled (multiple-of-128) multi-step grid path.
    B2, C2, H2, W2 = 4, 256, 32, 32
    x2 = jax.random.normal(jax.random.PRNGKey(0), (B2, C2, H2, W2), dtype=jnp.float32)
    y2 = jax.block_until_ready(blur(x2))
    y2_ref = _blur_ref(x2)
    assert jnp.allclose(y2, y2_ref, atol=1e-5, rtol=1e-5), "mismatch vs reference (tiled)"

    print("KERNEL_OK")
</pallas_src>

<mosaic_0001>
module attributes {stable_mosaic.version = 11 : i64} {
  func.func @_blur_kernel(%arg0: i32, %arg1: memref<16x16x8xf32, #tpu.memory_space<vmem>>, %arg2: memref<16x16x8xf32, #tpu.memory_space<vmem>>, %arg3: memref<16x16x8xf32, #tpu.memory_space<vmem>>) attributes {dimension_semantics = [#tpu.dimension_semantics<parallel>], iteration_bounds = array<i64: 1>, scalar_prefetch = 0 : i64, scratch_operands = 1 : i64, tpu.core_type = #tpu.core_type<tc>, window_params = [{transform_indices = @transform_0, window_bounds = array<i64: 16, 16, 8>}, {transform_indices = @transform_1, window_bounds = array<i64: 16, 16, 8>}]} {
    %c0 = arith.constant 0 : index
    %c0_0 = arith.constant 0 : index
    %c0_1 = arith.constant 0 : index
    %0 = vector.load %arg1[%c0, %c0_0, %c0_1] : memref<16x16x8xf32, #tpu.memory_space<vmem>>, vector<16x16x8xf32>
    %1 = vector.extract_strided_slice %0 {offsets = [0, 0, 0], sizes = [16, 14, 8], strides = [1, 1, 1]} : vector<16x16x8xf32> to vector<16x14x8xf32>
    %2 = vector.extract_strided_slice %0 {offsets = [0, 2, 0], sizes = [16, 14, 8], strides = [1, 1, 1]} : vector<16x16x8xf32> to vector<16x14x8xf32>
    %3 = arith.addf %1, %2 : vector<16x14x8xf32>
    %4 = vector.extract_strided_slice %0 {offsets = [0, 1, 0], sizes = [16, 14, 8], strides = [1, 1, 1]} : vector<16x16x8xf32> to vector<16x14x8xf32>
    %5 = vector.extract_strided_slice %0 {offsets = [0, 1, 0], sizes = [16, 14, 8], strides = [1, 1, 1]} : vector<16x16x8xf32> to vector<16x14x8xf32>
    %6 = arith.addf %4, %5 : vector<16x14x8xf32>
    %7 = arith.addf %3, %6 : vector<16x14x8xf32>
    %c0_2 = arith.constant 0 : index
    %c1 = arith.constant 1 : index
    %c0_3 = arith.constant 0 : index
    %8 = vector.load %arg3[%c0_2, %c1, %c0_3] : memref<16x16x8xf32, #tpu.memory_space<vmem>>, vector<16x14x8xf32>
    tpu.vector_store %arg3[%c0_2, %c1, %c0_3], %7 {strides = array<i32>} : memref<16x16x8xf32, #tpu.memory_space<vmem>>, vector<16x14x8xf32>,
    %9 = vector.extract_strided_slice %0 {offsets = [0, 0, 0], sizes = [16, 1, 8], strides = [1, 1, 1]} : vector<16x16x8xf32> to vector<16x1x8xf32>
    %10 = vector.extract_strided_slice %0 {offsets = [0, 1, 0], sizes = [16, 1, 8], strides = [1, 1, 1]} : vector<16x16x8xf32> to vector<16x1x8xf32>
    %11 = arith.addf %9, %10 : vector<16x1x8xf32>
    %cst = arith.constant 2.000000e+00 : f32
    %12 = vector.broadcast %cst : f32 to vector<16x1x8xf32>
    %13 = arith.mulf %12, %11 : vector<16x1x8xf32>
    %c0_4 = arith.constant 0 : index
    %c0_5 = arith.constant 0 : index
    %c0_6 = arith.constant 0 : index
    %14 = vector.load %arg3[%c0_4, %c0_5, %c0_6] : memref<16x16x8xf32, #tpu.memory_space<vmem>>, vector<16x1x8xf32>
    tpu.vector_store %arg3[%c0_4, %c0_5, %c0_6], %13 {strides = array<i32>} : memref<16x16x8xf32, #tpu.memory_space<vmem>>, vector<16x1x8xf32>,
    %15 = vector.extract_strided_slice %0 {offsets = [0, 15, 0], sizes = [16, 1, 8], strides = [1, 1, 1]} : vector<16x16x8xf32> to vector<16x1x8xf32>
    %16 = vector.extract_strided_slice %0 {offsets = [0, 14, 0], sizes = [16, 1, 8], strides = [1, 1, 1]} : vector<16x16x8xf32> to vector<16x1x8xf32>
    %17 = arith.addf %15, %16 : vector<16x1x8xf32>
    %cst_7 = arith.constant 2.000000e+00 : f32
    %18 = vector.broadcast %cst_7 : f32 to vector<16x1x8xf32>
    %19 = arith.mulf %18, %17 : vector<16x1x8xf32>
    %c0_8 = arith.constant 0 : index
    %c15 = arith.constant 15 : index
    %c0_9 = arith.constant 0 : index
    %20 = vector.load %arg3[%c0_8, %c15, %c0_9] : memref<16x16x8xf32, #tpu.memory_space<vmem>>, vector<16x1x8xf32>
    tpu.vector_store %arg3[%c0_8, %c15, %c0_9], %19 {strides = array<i32>} : memref<16x16x8xf32, #tpu.memory_space<vmem>>, vector<16x1x8xf32>,
    %c0_10 = arith.constant 0 : index
    %c0_11 = arith.constant 0 : index
    %c0_12 = arith.constant 0 : index
    %21 = vector.load %arg3[%c0_10, %c0_11, %c0_12] : memref<16x16x8xf32, #tpu.memory_space<vmem>>, vector<16x16x8xf32>
    %22 = vector.extract_strided_slice %21 {offsets = [0, 0, 0], sizes = [14, 16, 8], strides = [1, 1, 1]} : vector<16x16x8xf32> to vector<14x16x8xf32>
    %23 = vector.extract_strided_slice %21 {offsets = [2, 0, 0], sizes = [14, 16, 8], strides = [1, 1, 1]} : vector<16x16x8xf32> to vector<14x16x8xf32>
    %24 = arith.addf %22, %23 : vector<14x16x8xf32>
    %25 = vector.extract_strided_slice %21 {offsets = [1, 0, 0], sizes = [14, 16, 8], strides = [1, 1, 1]} : vector<16x16x8xf32> to vector<14x16x8xf32>
    %26 = vector.extract_strided_slice %21 {offsets = [1, 0, 0], sizes = [14, 16, 8], strides = [1, 1, 1]} : vector<16x16x8xf32> to vector<14x16x8xf32>
    %27 = arith.addf %25, %26 : vector<14x16x8xf32>
    %28 = arith.addf %24, %27 : vector<14x16x8xf32>
    %cst_13 = arith.constant 6.250000e-02 : f32
    %29 = vector.broadcast %cst_13 : f32 to vector<14x16x8xf32>
    %30 = arith.mulf %28, %29 : vector<14x16x8xf32>
    %c1_14 = arith.constant 1 : index
    %c0_15 = arith.constant 0 : index
    %c0_16 = arith.constant 0 : index
    %31 = vector.load %arg2[%c1_14, %c0_15, %c0_16] : memref<16x16x8xf32, #tpu.memory_space<vmem>>, vector<14x16x8xf32>
    tpu.vector_store %arg2[%c1_14, %c0_15, %c0_16], %30 {strides = array<i32>} : memref<16x16x8xf32, #tpu.memory_space<vmem>>, vector<14x16x8xf32>,
    %32 = vector.extract_strided_slice %21 {offsets = [0, 0, 0], sizes = [1, 16, 8], strides = [1, 1, 1]} : vector<16x16x8xf32> to vector<1x16x8xf32>
    %33 = vector.extract_strided_slice %21 {offsets = [1, 0, 0], sizes = [1, 16, 8], strides = [1, 1, 1]} : vector<16x16x8xf32> to vector<1x16x8xf32>
    %34 = arith.addf %32, %33 : vector<1x16x8xf32>
    %cst_17 = arith.constant 1.250000e-01 : f32
    %35 = vector.broadcast %cst_17 : f32 to vector<1x16x8xf32>
    %36 = arith.mulf %34, %35 : vector<1x16x8xf32>
    %c0_18 = arith.constant 0 : index
    %c0_19 = arith.constant 0 : index
    %c0_20 = arith.constant 0 : index
    %37 = vector.load %arg2[%c0_18, %c0_19, %c0_20] : memref<16x16x8xf32, #tpu.memory_space<vmem>>, vector<1x16x8xf32>
    tpu.vector_store %arg2[%c0_18, %c0_19, %c0_20], %36 {strides = array<i32>} : memref<16x16x8xf32, #tpu.memory_space<vmem>>, vector<1x16x8xf32>,
    %38 = vector.extract_strided_slice %21 {offsets = [15, 0, 0], sizes = [1, 16, 8], strides = [1, 1, 1]} : vector<16x16x8xf32> to vector<1x16x8xf32>
    %39 = vector.extract_strided_slice %21 {offsets = [14, 0, 0], sizes = [1, 16, 8], strides = [1, 1, 1]} : vector<16x16x8xf32> to vector<1x16x8xf32>
    %40 = arith.addf %38, %39 : vector<1x16x8xf32>
    %cst_21 = arith.constant 1.250000e-01 : f32
    %41 = vector.broadcast %cst_21 : f32 to vector<1x16x8xf32>
    %42 = arith.mulf %40, %41 : vector<1x16x8xf32>
    %c15_22 = arith.constant 15 : index
    %c0_23 = arith.constant 0 : index
    %c0_24 = arith.constant 0 : index
    %43 = vector.load %arg2[%c15_22, %c0_23, %c0_24] : memref<16x16x8xf32, #tpu.memory_space<vmem>>, vector<1x16x8xf32>
    tpu.vector_store %arg2[%c15_22, %c0_23, %c0_24], %42 {strides = array<i32>} : memref<16x16x8xf32, #tpu.memory_space<vmem>>, vector<1x16x8xf32>,
    return
  }
  func.func @transform_0(%arg0: i32) -> (i32, i32, i32) {
    %c0_i32 = arith.constant 0 : i32
    %c0_i32_0 = arith.constant 0 : i32
    %c0_i32_1 = arith.constant 0 : i32
    return %c0_i32, %c0_i32_0, %arg0 : i32, i32, i32
  }
  func.func @transform_1(%arg0: i32) -> (i32, i32, i32) {
    %c0_i32 = arith.constant 0 : i32
    %c0_i32_0 = arith.constant 0 : i32
    %c0_i32_1 = arith.constant 0 : i32
    return %c0_i32, %c0_i32_0, %arg0 : i32, i32, i32
  }
}

</mosaic_0001>

<llo_original>
// kernel: tpu_custom_call.1
$region0: #{tpu_custom_call.1}
  #allocation0 [shape = 'u32[]', space=smem, size = 0x4, offset = 0x4, fixed_abs, tag = 'smem constant byte address 0x4 - core index']
  #allocation1 [shape = 'u32[144,128]{1,0:T(1,128)}', space=vmem, size = 0x12000, scoped, tag = 'internal scratch']
  #allocation2 [shape = 'f32[16,16,8]{2,1,0:T(8,128)}', space=vmem, size = 0x20000, scoped, tag = 'scratch operand']
  %s0 = inlined_call_operand.vmem [shape: f32[16,16,8], index: 0, kind: input, shape index: {}]
  %s1 = inlined_call_operand.vmem [shape: f32[16,16,8], index: 1, kind: output, shape index: {}]
  %s2 = sld [smem:[#allocation0]]
  $region14: #{tpu_custom_call.1} parent=0
    _
  %s4 = ssub.s32 1, %s2
  %s5 = scalar_select 0, %s4, %s2
  // Predicated region
  $region2: #{tpu_custom_call.1} parent=0 // pred_check
    _
  $region3: #{tpu_custom_call.1} parent=0 // pred_check_branch
    %7 = sbr.rel (0) target = $region5
  $region4: #{tpu_custom_call.1} parent=0 // pred_region
    _
  $region5: #{tpu_custom_call.1} parent=0 // pred_fallthru
    _
  %v8 = vld [vmem:[%s0] sm:$0xff]
  %v9 = vld [vmem:[%s0 + $0x8] sm:$0xff]
  %v10 = vld [vmem:[%s0 + $0x10] sm:$0xff]
  %v11 = vld [vmem:[%s0 + $0x18] sm:$0xff]
  %v12 = vld [vmem:[%s0 + $0x20] sm:$0xff]
  %v13 = vld [vmem:[%s0 + $0x28] sm:$0xff]
  %v14 = vld [vmem:[%s0 + $0x30] sm:$0xff]
  %v15 = vld [vmem:[%s0 + $0x38] sm:$0xff]
  %v16 = vld [vmem:[%s0 + $0x40] sm:$0xff]
  %v17 = vld [vmem:[%s0 + $0x48] sm:$0xff]
  %v18 = vld [vmem:[%s0 + $0x50] sm:$0xff]
  %v19 = vld [vmem:[%s0 + $0x58] sm:$0xff]
  %v20 = vld [vmem:[%s0 + $0x60] sm:$0xff]
  %v21 = vld [vmem:[%s0 + $0x68] sm:$0xff]
  %v22 = vld [vmem:[%s0 + $0x70] sm:$0xff]
  %v23 = vld [vmem:[%s0 + $0x78] sm:$0xff]
  %v24 = vld [vmem:[%s0 + $0x80] sm:$0xff]
  %v25 = vld [vmem:[%s0 + $0x88] sm:$0xff]
  %v26 = vld [vmem:[%s0 + $0x90] sm:$0xff]
  %v27 = vld [vmem:[%s0 + $0x98] sm:$0xff]
  %v28 = vld [vmem:[%s0 + $0xa0] sm:$0xff]
  %v29 = vld [vmem:[%s0 + $0xa8] sm:$0xff]
  %v30 = vld [vmem:[%s0 + $0xb0] sm:$0xff]
  %v31 = vld [vmem:[%s0 + $0xb8] sm:$0xff]
  %v32 = vld [vmem:[%s0 + $0xc0] sm:$0xff]
  %v33 = vld [vmem:[%s0 + $0xc8] sm:$0xff]
  %v34 = vld [vmem:[%s0 + $0xd0] sm:$0xff]
  %v35 = vld [vmem:[%s0 + $0xd8] sm:$0xff]
  %v36 = vld [vmem:[%s0 + $0xe0] sm:$0xff]
  %v37 = vld [vmem:[%s0 + $0xe8] sm:$0xff]
  %v38 = vld [vmem:[%s0 + $0xf0] sm:$0xff]
  %v39 = vld [vmem:[%s0 + $0xf8] sm:$0xff]
  %vm72 = vcmask 1045504
  %v73 = vrot.slane %v8, 2
  %v74 = vrot.slane %v9, 2
  %v75 = vsel %vm72, %v73, %v74
  %v76 = vrot.slane %v10, 2
  %v77 = vrot.slane %v11, 2
  %v78 = vsel %vm72, %v76, %v77
  %v79 = vrot.slane %v12, 2
  %v80 = vrot.slane %v13, 2
  %v81 = vsel %vm72, %v79, %v80
  %v82 = vrot.slane %v14, 2
  %v83 = vrot.slane %v15, 2
  %v84 = vsel %vm72, %v82, %v83
  %v85 = vrot.slane %v16, 2
  %v86 = vrot.slane %v17, 2
  %v87 = vsel %vm72, %v85, %v86
  %v88 = vrot.slane %v18, 2
  %v89 = vrot.slane %v19, 2
  %v90 = vsel %vm72, %v88, %v89
  %v91 = vrot.slane %v20, 2
  %v92 = vrot.slane %v21, 2
  %v93 = vsel %vm72, %v91, %v92
  %v94 = vrot.slane %v22, 2
  %v95 = vrot.slane %v23, 2
  %v96 = vsel %vm72, %v94, %v95
  %v97 = vrot.slane %v24, 2
  %v98 = vrot.slane %v25, 2
  %v99 = vsel %vm72, %v97, %v98
  %v100 = vrot.slane %v26, 2
  %v101 = vrot.slane %v27, 2
  %v102 = vsel %vm72, %v100, %v101
  %v103 = vrot.slane %v28, 2
  %v104 = vrot.slane %v29, 2
  %v105 = vsel %vm72, %v103, %v104
  %v106 = vrot.slane %v30, 2
  %v107 = vrot.slane %v31, 2
  %v108 = vsel %vm72, %v106, %v107
  %v109 = vrot.slane %v32, 2
  %v110 = vrot.slane %v33, 2
  %v111 = vsel %vm72, %v109, %v110
  %v112 = vrot.slane %v34, 2
  %v113 = vrot.slane %v35, 2
  %v114 = vsel %vm72, %v112, %v113
  %v115 = vrot.slane %v36, 2
  %v116 = vrot.slane %v37, 2
  %v117 = vsel %vm72, %v115, %v116
  %v118 = vrot.slane %v38, 2
  %v119 = vrot.slane %v39, 2
  %v120 = vsel %vm72, %v118, %v119
  %v153 = vadd.f32 %v8, %v75
  %v154 = vadd.f32 %v9, %v74
  %v155 = vadd.f32 %v10, %v78
  %v156 = vadd.f32 %v11, %v77
  %v157 = vadd.f32 %v12, %v81
  %v158 = vadd.f32 %v13, %v80
  %v159 = vadd.f32 %v14, %v84
  %v160 = vadd.f32 %v15, %v83
  %v161 = vadd.f32 %v16, %v87
  %v162 = vadd.f32 %v17, %v86
  %v163 = vadd.f32 %v18, %v90
  %v164 = vadd.f32 %v19, %v89
  %v165 = vadd.f32 %v20, %v93
  %v166 = vadd.f32 %v21, %v92
  %v167 = vadd.f32 %v22, %v96
  %v168 = vadd.f32 %v23, %v95
  %v169 = vadd.f32 %v24, %v99
  %v170 = vadd.f32 %v25, %v98
  %v171 = vadd.f32 %v26, %v102
  %v172 = vadd.f32 %v27, %v101
  %v173 = vadd.f32 %v28, %v105
  %v174 = vadd.f32 %v29, %v104
  %v175 = vadd.f32 %v30, %v108
  %v176 = vadd.f32 %v31, %v107
  %v177 = vadd.f32 %v32, %v111
  %v178 = vadd.f32 %v33, %v110
  %v179 = vadd.f32 %v34, %v114
  %v180 = vadd.f32 %v35, %v113
  %v181 = vadd.f32 %v36, %v117
  %v182 = vadd.f32 %v37, %v116
  %v183 = vadd.f32 %v38, %v120
  %v184 = vadd.f32 %v39, %v119
  %v185 = vadd.f32 %v8, %v8
  %v186 = vadd.f32 %v9, %v9
  %v187 = vadd.f32 %v10, %v10
  %v188 = vadd.f32 %v11, %v11
  %v189 = vadd.f32 %v12, %v12
  %v190 = vadd.f32 %v13, %v13
  %v191 = vadd.f32 %v14, %v14
  %v192 = vadd.f32 %v15, %v15
  %v193 = vadd.f32 %v16, %v16
  %v194 = vadd.f32 %v17, %v17
  %v195 = vadd.f32 %v18, %v18
  %v196 = vadd.f32 %v19, %v19
  %v197 = vadd.f32 %v20, %v20
  %v198 = vadd.f32 %v21, %v21
  %v199 = vadd.f32 %v22, %v22
  %v200 = vadd.f32 %v23, %v23
  %v201 = vadd.f32 %v24, %v24
  %v202 = vadd.f32 %v25, %v25
  %v203 = vadd.f32 %v26, %v26
  %v204 = vadd.f32 %v27, %v27
  %v205 = vadd.f32 %v28, %v28
  %v206 = vadd.f32 %v29, %v29
  %v207 = vadd.f32 %v30, %v30
  %v208 = vadd.f32 %v31, %v31
  %v209 = vadd.f32 %v32, %v32
  %v210 = vadd.f32 %v33, %v33
  %v211 = vadd.f32 %v34, %v34
  %v212 = vadd.f32 %v35, %v35
  %v213 = vadd.f32 %v36, %v36
  %v214 = vadd.f32 %v37, %v37
  %v215 = vadd.f32 %v38, %v38
  %v216 = vadd.f32 %v39, %v39
  %vm249 = vcmask 1046528
  %v250 = vrot.slane %v185, 1
  %v251 = vrot.slane %v186, 1
  %v252 = vsel %vm249, %v250, %v251
  %v253 = vrot.slane %v187, 1
  %v254 = vrot.slane %v188, 1
  %v255 = vsel %vm249, %v253, %v254
  %v256 = vrot.slane %v189, 1
  %v257 = vrot.slane %v190, 1
  %v258 = vsel %vm249, %v256, %v257
  %v259 = vrot.slane %v191, 1
  %v260 = vrot.slane %v192, 1
  %v261 = vsel %vm249, %v259, %v260
  %v262 = vrot.slane %v193, 1
  %v263 = vrot.slane %v194, 1
  %v264 = vsel %vm249, %v262, %v263
  %v265 = vrot.slane %v195, 1
  %v266 = vrot.slane %v196, 1
  %v267 = vsel %vm249, %v265, %v266
  %v268 = vrot.slane %v197, 1
  %v269 = vrot.slane %v198, 1
  %v270 = vsel %vm249, %v268, %v269
  %v271 = vrot.slane %v199, 1
  %v272 = vrot.slane %v200, 1
  %v273 = vsel %vm249, %v271, %v272
  %v274 = vrot.slane %v201, 1
  %v275 = vrot.slane %v202, 1
  %v276 = vsel %vm249, %v274, %v275
  %v277 = vrot.slane %v203, 1
  %v278 = vrot.slane %v204, 1
  %v279 = vsel %vm249, %v277, %v278
  %v280 = vrot.slane %v205, 1
  %v281 = vrot.slane %v206, 1
  %v282 = vsel %vm249, %v280, %v281
  %v283 = vrot.slane %v207, 1
  %v284 = vrot.slane %v208, 1
  %v285 = vsel %vm249, %v283, %v284
  %v286 = vrot.slane %v209, 1
  %v287 = vrot.slane %v210, 1
  %v288 = vsel %vm249, %v286, %v287
  %v289 = vrot.slane %v211, 1
  %v290 = vrot.slane %v212, 1
  %v291 = vsel %vm249, %v289, %v290
  %v292 = vrot.slane %v213, 1
  %v293 = vrot.slane %v214, 1
  %v294 = vsel %vm249, %v292, %v293
  %v295 = vrot.slane %v215, 1
  %v296 = vrot.slane %v216, 1
  %v297 = vsel %vm249, %v295, %v296
  %v330 = vadd.f32 %v153, %v252
  %v331 = vadd.f32 %v154, %v251
  %v332 = vadd.f32 %v155, %v255
  %v333 = vadd.f32 %v156, %v254
  %v334 = vadd.f32 %v157, %v258
  %v335 = vadd.f32 %v158, %v257
  %v336 = vadd.f32 %v159, %v261
  %v337 = vadd.f32 %v160, %v260
  %v338 = vadd.f32 %v161, %v264
  %v339 = vadd.f32 %v162, %v263
  %v340 = vadd.f32 %v163, %v267
  %v341 = vadd.f32 %v164, %v266
  %v342 = vadd.f32 %v165, %v270
  %v343 = vadd.f32 %v166, %v269
  %v344 = vadd.f32 %v167, %v273
  %v345 = vadd.f32 %v168, %v272
  %v346 = vadd.f32 %v169, %v276
  %v347 = vadd.f32 %v170, %v275
  %v348 = vadd.f32 %v171, %v279
  %v349 = vadd.f32 %v172, %v278
  %v350 = vadd.f32 %v173, %v282
  %v351 = vadd.f32 %v174, %v281
  %v352 = vadd.f32 %v175, %v285
  %v353 = vadd.f32 %v176, %v284
  %v354 = vadd.f32 %v177, %v288
  %v355 = vadd.f32 %v178, %v287
  %v356 = vadd.f32 %v179, %v291
  %v357 = vadd.f32 %v180, %v290
  %v358 = vadd.f32 %v181, %v294
  %v359 = vadd.f32 %v182, %v293
  %v360 = vadd.f32 %v183, %v297
  %v361 = vadd.f32 %v184, %v296
  %vm362 = vcmask 64512
  %363 = vst.msk [vmem:[#allocation2 + $0x1] sm:$0xff] %vm362, %v330
  %vm364 = vcmask 62464
  %365 = vst.msk [vmem:[#allocation2 + $0x9] sm:$0x3f] %vm364, %v331
  %366 = vst.msk [vmem:[#allocation2 + $0x11] sm:$0xff] %vm362, %v332
  %367 = vst.msk [vmem:[#allocation2 + $0x19] sm:$0x3f] %vm364, %v333
  %368 = vst.msk [vmem:[#allocation2 + $0x21] sm:$0xff] %vm362, %v334
  %369 = vst.msk [vmem:[#allocation2 + $0x29] sm:$0x3f] %vm364, %v335
  %370 = vst.msk [vmem:[#allocation2 + $0x31] sm:$0xff] %vm362, %v336
  %371 = vst.msk [vmem:[#allocation2 + $0x39] sm:$0x3f] %vm364, %v337
  %372 = vst.msk [vmem:[#allocation2 + $0x41] sm:$0xff] %vm362, %v338
  %373 = vst.msk [vmem:[#allocation2 + $0x49] sm:$0x3f] %vm364, %v339
  %374 = vst.msk [vmem:[#allocation2 + $0x51] sm:$0xff] %vm362, %v340
  %375 = vst.msk [vmem:[#allocation2 + $0x59] sm:$0x3f] %vm364, %v341
  %376 = vst.msk [vmem:[#allocation2 + $0x61] sm:$0xff] %vm362, %v342
  %377 = vst.msk [vmem:[#allocation2 + $0x69] sm:$0x3f] %vm364, %v343
  %378 = vst.msk [vmem:[#allocation2 + $0x71] sm:$0xff] %vm362, %v344
  %379 = vst.msk [vmem:[#allocation2 + $0x79] sm:$0x3f] %vm364, %v345
  %380 = vst.msk [vmem:[#allocation2 + $0x81] sm:$0xff] %vm362, %v346
  %381 = vst.msk [vmem:[#allocation2 + $0x89] sm:$0x3f] %vm364, %v347
  %382 = vst.msk [vmem:[#allocation2 + $0x91] sm:$0xff] %vm362, %v348
  %383 = vst.msk [vmem:[#allocation2 + $0x99] sm:$0x3f] %vm364, %v349
  %384 = vst.msk [vmem:[#allocation2 + $0xa1] sm:$0xff] %vm362, %v350
  %385 = vst.msk [vmem:[#allocation2 + $0xa9] sm:$0x3f] %vm364, %v351
  %386 = vst.msk [vmem:[#allocation2 + $0xb1] sm:$0xff] %vm362, %v352
  %387 = vst.msk [vmem:[#allocation2 + $0xb9] sm:$0x3f] %vm364, %v353
  %388 = vst.msk [vmem:[#allocation2 + $0xc1] sm:$0xff] %vm362, %v354
  %389 = vst.msk [vmem:[#allocation2 + $0xc9] sm:$0x3f] %vm364, %v355
  %390 = vst.msk [vmem:[#allocation2 + $0xd1] sm:$0xff] %vm362, %v356
  %391 = vst.msk [vmem:[#allocation2 + $0xd9] sm:$0x3f] %vm364, %v357
  %392 = vst.msk [vmem:[#allocation2 + $0xe1] sm:$0xff] %vm362, %v358
  %393 = vst.msk [vmem:[#allocation2 + $0xe9] sm:$0x3f] %vm364, %v359
  %394 = vst.msk [vmem:[#allocation2 + $0xf1] sm:$0xff] %vm362, %v360
  %395 = vst.msk [vmem:[#allocation2 + $0xf9] sm:$0x3f] %vm364, %v361
  %v396 = vrot.slane %v8, 1
  %v397 = vrot.slane %v10, 1
  %v398 = vrot.slane %v12, 1
  %v399 = vrot.slane %v14, 1
  %v400 = vrot.slane %v16, 1
  %v401 = vrot.slane %v18, 1
  %v402 = vrot.slane %v20, 1
  %v403 = vrot.slane %v22, 1
  %v404 = vrot.slane %v24, 1
  %v405 = vrot.slane %v26, 1
  %v406 = vrot.slane %v28, 1
  %v407 = vrot.slane %v30, 1
  %v408 = vrot.slane %v32, 1
  %v409 = vrot.slane %v34, 1
  %v410 = vrot.slane %v36, 1
  %v411 = vrot.slane %v38, 1
  %v428 = vadd.f32 %v8, %v396
  %v429 = vadd.f32 %v10, %v397
  %v430 = vadd.f32 %v12, %v398
  %v431 = vadd.f32 %v14, %v399
  %v432 = vadd.f32 %v16, %v400
  %v433 = vadd.f32 %v18, %v401
  %v434 = vadd.f32 %v20, %v402
  %v435 = vadd.f32 %v22, %v403
  %v436 = vadd.f32 %v24, %v404
  %v437 = vadd.f32 %v26, %v405
  %v438 = vadd.f32 %v28, %v406
  %v439 = vadd.f32 %v30, %v407
  %v440 = vadd.f32 %v32, %v408
  %v441 = vadd.f32 %v34, %v409
  %v442 = vadd.f32 %v36, %v410
  %v443 = vadd.f32 %v38, %v411
  %v444 = vmul.f32 %v428, 2.0
  %v445 = vmul.f32 %v429, 2.0
  %v446 = vmul.f32 %v430, 2.0
  %v447 = vmul.f32 %v431, 2.0
  %v448 = vmul.f32 %v432, 2.0
  %v449 = vmul.f32 %v433, 2.0
  %v450 = vmul.f32 %v434, 2.0
  %v451 = vmul.f32 %v435, 2.0
  %v452 = vmul.f32 %v436, 2.0
  %v453 = vmul.f32 %v437, 2.0
  %v454 = vmul.f32 %v438, 2.0
  %v455 = vmul.f32 %v439, 2.0
  %v456 = vmul.f32 %v440, 2.0
  %v457 = vmul.f32 %v441, 2.0
  %v458 = vmul.f32 %v442, 2.0
  %v459 = vmul.f32 %v443, 2.0
  %vm460 = vcmask 57344
  %461 = vst.msk [vmem:[#allocation2] sm:$0x1] %vm460, %v444
  %462 = vst.msk [vmem:[#allocation2 + $0x10] sm:$0x1] %vm460, %v445
  %463 = vst.msk [vmem:[#allocation2 + $0x20] sm:$0x1] %vm460, %v446
  %464 = vst.msk [vmem:[#allocation2 + $0x30] sm:$0x1] %vm460, %v447
  %465 = vst.msk [vmem:[#allocation2 + $0x40] sm:$0x1] %vm460, %v448
  %466 = vst.msk [vmem:[#allocation2 + $0x50] sm:$0x1] %vm460, %v449
  %467 = vst.msk [vmem:[#allocation2 + $0x60] sm:$0x1] %vm460, %v450
  %468 = vst.msk [vmem:[#allocation2 + $0x70] sm:$0x1] %vm460, %v451
  %469 = vst.msk [vmem:[#allocation2 + $0x80] sm:$0x1] %vm460, %v452
  %470 = vst.msk [vmem:[#allocation2 + $0x90] sm:$0x1] %vm460, %v453
  %471 = vst.msk [vmem:[#allocation2 + $0xa0] sm:$0x1] %vm460, %v454
  %472 = vst.msk [vmem:[#allocation2 + $0xb0] sm:$0x1] %vm460, %v455
  %473 = vst.msk [vmem:[#allocation2 + $0xc0] sm:$0x1] %vm460, %v456
  %474 = vst.msk [vmem:[#allocation2 + $0xd0] sm:$0x1] %vm460, %v457
  %475 = vst.msk [vmem:[#allocation2 + $0xe0] sm:$0x1] %vm460, %v458
  %476 = vst.msk [vmem:[#allocation2 + $0xf0] sm:$0x1] %vm460, %v459
  %v477 = vrot.slane %v9, 7
  %v478 = vrot.slane %v11, 7
  %v479 = vrot.slane %v13, 7
  %v480 = vrot.slane %v15, 7
  %v481 = vrot.slane %v17, 7
  %v482 = vrot.slane %v19, 7
  %v483 = vrot.slane %v21, 7
  %v484 = vrot.slane %v23, 7
  %v485 = vrot.slane %v25, 7
  %v486 = vrot.slane %v27, 7
  %v487 = vrot.slane %v29, 7
  %v488 = vrot.slane %v31, 7
  %v489 = vrot.slane %v33, 7
  %v490 = vrot.slane %v35, 7
  %v491 = vrot.slane %v37, 7
  %v492 = vrot.slane %v39, 7
  %v509 = vadd.f32 %v9, %v477
  %v510 = vadd.f32 %v11, %v478
  %v511 = vadd.f32 %v13, %v479
  %v512 = vadd.f32 %v15, %v480
  %v513 = vadd.f32 %v17, %v481
  %v514 = vadd.f32 %v19, %v482
  %v515 = vadd.f32 %v21, %v483
  %v516 = vadd.f32 %v23, %v484
  %v517 = vadd.f32 %v25, %v485
  %v518 = vadd.f32 %v27, %v486
  %v519 = vadd.f32 %v29, %v487
  %v520 = vadd.f32 %v31, %v488
  %v521 = vadd.f32 %v33, %v489
  %v522 = vadd.f32 %v35, %v490
  %v523 = vadd.f32 %v37, %v491
  %v524 = vadd.f32 %v39, %v492
  %v525 = vmul.f32 %v509, 2.0
  %v526 = vmul.f32 %v510, 2.0
  %v527 = vmul.f32 %v511, 2.0
  %v528 = vmul.f32 %v512, 2.0
  %v529 = vmul.f32 %v513, 2.0
  %v530 = vmul.f32 %v514, 2.0
  %v531 = vmul.f32 %v515, 2.0
  %v532 = vmul.f32 %v516, 2.0
  %v533 = vmul.f32 %v517, 2.0
  %v534 = vmul.f32 %v518, 2.0
  %v535 = vmul.f32 %v519, 2.0
  %v536 = vmul.f32 %v520, 2.0
  %v537 = vmul.f32 %v521, 2.0
  %v538 = vmul.f32 %v522, 2.0
  %v539 = vmul.f32 %v523, 2.0
  %v540 = vmul.f32 %v524, 2.0
  %vm541 = vcmask 64519
  %542 = vst.msk [vmem:[#allocation2 + $0x8] sm:$0x80] %vm541, %v525
  %543 = vst.msk [vmem:[#allocation2 + $0x18] sm:$0x80] %vm541, %v526
  %544 = vst.msk [vmem:[#allocation2 + $0x28] sm:$0x80] %vm541, %v527
  %545 = vst.msk [vmem:[#allocation2 + $0x38] sm:$0x80] %vm541, %v528
  %546 = vst.msk [vmem:[#allocation2 + $0x48] sm:$0x80] %vm541, %v529
  %547 = vst.msk [vmem:[#allocation2 + $0x58] sm:$0x80] %vm541, %v530
  %548 = vst.msk [vmem:[#allocation2 + $0x68] sm:$0x80] %vm541, %v531
  %549 = vst.msk [vmem:[#allocation2 + $0x78] sm:$0x80] %vm541, %v532
  %550 = vst.msk [vmem:[#allocation2 + $0x88] sm:$0x80] %vm541, %v533
  %551 = vst.msk [vmem:[#allocation2 + $0x98] sm:$0x80] %vm541, %v534
  %552 = vst.msk [vmem:[#allocation2 + $0xa8] sm:$0x80] %vm541, %v535
  %553 = vst.msk [vmem:[#allocation2 + $0xb8] sm:$0x80] %vm541, %v536
  %554 = vst.msk [vmem:[#allocation2 + $0xc8] sm:$0x80] %vm541, %v537
  %555 = vst.msk [vmem:[#allocation2 + $0xd8] sm:$0x80] %vm541, %v538
  %556 = vst.msk [vmem:[#allocation2 + $0xe8] sm:$0x80] %vm541, %v539
  %557 = vst.msk [vmem:[#allocation2 + $0xf8] sm:$0x80] %vm541, %v540
  %v558 = vld [vmem:[#allocation2] sm:$0xff]
  %v559 = vld [vmem:[#allocation2 + $0x8] sm:$0xff]
  %v560 = vld [vmem:[#allocation2 + $0x10] sm:$0xff]
  %v561 = vld [vmem:[#allocation2 + $0x18] sm:$0xff]
  %v562 = vld [vmem:[#allocation2 + $0x20] sm:$0xff]
  %v563 = vld [vmem:[#allocation2 + $0x28] sm:$0xff]
  %v564 = vld [vmem:[#allocation2 + $0x30] sm:$0xff]
  %v565 = vld [vmem:[#allocation2 + $0x38] sm:$0xff]
  %v566 = vld [vmem:[#allocation2 + $0x40] sm:$0xff]
  %v567 = vld [vmem:[#allocation2 + $0x48] sm:$0xff]
  %v568 = vld [vmem:[#allocation2 + $0x50] sm:$0xff]
  %v569 = vld [vmem:[#allocation2 + $0x58] sm:$0xff]
  %v570 = vld [vmem:[#allocation2 + $0x60] sm:$0xff]
  %v571 = vld [vmem:[#allocation2 + $0x68] sm:$0xff]
  %v572 = vld [vmem:[#allocation2 + $0x70] sm:$0xff]
  %v573 = vld [vmem:[#allocation2 + $0x78] sm:$0xff]
  %v574 = vld [vmem:[#allocation2 + $0x80] sm:$0xff]
  %v575 = vld [vmem:[#allocation2 + $0x88] sm:$0xff]
  %v576 = vld [vmem:[#allocation2 + $0x90] sm:$0xff]
  %v577 = vld [vmem:[#allocation2 + $0x98] sm:$0xff]
  %v578 = vld [vmem:[#allocation2 + $0xa0] sm:$0xff]
  %v579 = vld [vmem:[#allocation2 + $0xa8] sm:$0xff]
  %v580 = vld [vmem:[#allocation2 + $0xb0] sm:$0xff]
  %v581 = vld [vmem:[#allocation2 + $0xb8] sm:$0xff]
  %v582 = vld [vmem:[#allocation2 + $0xc0] sm:$0xff]
  %v583 = vld [vmem:[#allocation2 + $0xc8] sm:$0xff]
  %v584 = vld [vmem:[#allocation2 + $0xd0] sm:$0xff]
  %v585 = vld [vmem:[#allocation2 + $0xd8] sm:$0xff]
  %v586 = vld [vmem:[#allocation2 + $0xe0] sm:$0xff]
  %v587 = vld [vmem:[#allocation2 + $0xe8] sm:$0xff]
  %v588 = vld [vmem:[#allocation2 + $0xf0] sm:$0xff]
  %v589 = vld [vmem:[#allocation2 + $0xf8] sm:$0xff]
  %v590 = vadd.f32 %v558, %v562
  %v591 = vadd.f32 %v559, %v563
  %v592 = vadd.f32 %v560, %v564
  %v593 = vadd.f32 %v561, %v565
  %v594 = vadd.f32 %v562, %v566
  %v595 = vadd.f32 %v563, %v567
  %v596 = vadd.f32 %v564, %v568
  %v597 = vadd.f32 %v565, %v569
  %v598 = vadd.f32 %v566, %v570
  %v599 = vadd.f32 %v567, %v571
  %v600 = vadd.f32 %v568, %v572
  %v601 = vadd.f32 %v569, %v573
  %v602 = vadd.f32 %v570, %v574
  %v603 = vadd.f32 %v571, %v575
  %v604 = vadd.f32 %v572, %v576
  %v605 = vadd.f32 %v573, %v577
  %v606 = vadd.f32 %v574, %v578
  %v607 = vadd.f32 %v575, %v579
  %v608 = vadd.f32 %v576, %v580
  %v609 = vadd.f32 %v577, %v581
  %v610 = vadd.f32 %v578, %v582
  %v611 = vadd.f32 %v579, %v583
  %v612 = vadd.f32 %v580, %v584
  %v613 = vadd.f32 %v581, %v585
  %v614 = vadd.f32 %v582, %v586
  %v615 = vadd.f32 %v583, %v587
  %v616 = vadd.f32 %v584, %v588
  %v617 = vadd.f32 %v585, %v589
  %v618 = vadd.f32 %v560, %v560
  %v619 = vadd.f32 %v561, %v561
  %v620 = vadd.f32 %v562, %v562
  %v621 = vadd.f32 %v563, %v563
  %v622 = vadd.f32 %v564, %v564
  %v623 = vadd.f32 %v565, %v565
  %v624 = vadd.f32 %v566, %v566
  %v625 = vadd.f32 %v567, %v567
  %v626 = vadd.f32 %v568, %v568
  %v627 = vadd.f32 %v569, %v569
  %v628 = vadd.f32 %v570, %v570
  %v629 = vadd.f32 %v571, %v571
  %v630 = vadd.f32 %v572, %v572
  %v631 = vadd.f32 %v573, %v573
  %v632 = vadd.f32 %v574, %v574
  %v633 = vadd.f32 %v575, %v575
  %v634 = vadd.f32 %v576, %v576
  %v635 = vadd.f32 %v577, %v577
  %v636 = vadd.f32 %v578, %v578
  %v637 = vadd.f32 %v579, %v579
  %v638 = vadd.f32 %v580, %v580
  %v639 = vadd.f32 %v581, %v581
  %v640 = vadd.f32 %v582, %v582
  %v641 = vadd.f32 %v583, %v583
  %v642 = vadd.f32 %v584, %v584
  %v643 = vadd.f32 %v585, %v585
  %v644 = vadd.f32 %v586, %v586
  %v645 = vadd.f32 %v587, %v587
  %v646 = vadd.f32 %v590, %v618
  %v647 = vadd.f32 %v591, %v619
  %v648 = vadd.f32 %v592, %v620
  %v649 = vadd.f32 %v593, %v621
  %v650 = vadd.f32 %v594, %v622
  %v651 = vadd.f32 %v595, %v623
  %v652 = vadd.f32 %v596, %v624
  %v653 = vadd.f32 %v597, %v625
  %v654 = vadd.f32 %v598, %v626
  %v655 = vadd.f32 %v599, %v627
  %v656 = vadd.f32 %v600, %v628
  %v657 = vadd.f32 %v601, %v629
  %v658 = vadd.f32 %v602, %v630
  %v659 = vadd.f32 %v603, %v631
  %v660 = vadd.f32 %v604, %v632
  %v661 = vadd.f32 %v605, %v633
  %v662 = vadd.f32 %v606, %v634
  %v663 = vadd.f32 %v607, %v635
  %v664 = vadd.f32 %v608, %v636
  %v665 = vadd.f32 %v609, %v637
  %v666 = vadd.f32 %v610, %v638
  %v667 = vadd.f32 %v611, %v639
  %v668 = vadd.f32 %v612, %v640
  %v669 = vadd.f32 %v613, %v641
  %v670 = vadd.f32 %v614, %v642
  %v671 = vadd.f32 %v615, %v643
  %v672 = vadd.f32 %v616, %v644
  %v673 = vadd.f32 %v617, %v645
  %v674 = vmul.f32 %v646, 0.0625
  %v675 = vmul.f32 %v647, 0.0625
  %v676 = vmul.f32 %v648, 0.0625
  %v677 = vmul.f32 %v649, 0.0625
  %v678 = vmul.f32 %v650, 0.0625
  %v679 = vmul.f32 %v651, 0.0625
  %v680 = vmul.f32 %v652, 0.0625
  %v681 = vmul.f32 %v653, 0.0625
  %v682 = vmul.f32 %v654, 0.0625
  %v683 = vmul.f32 %v655, 0.0625
  %v684 = vmul.f32 %v656, 0.0625
  %v685 = vmul.f32 %v657, 0.0625
  %v686 = vmul.f32 %v658, 0.0625
  %v687 = vmul.f32 %v659, 0.0625
  %v688 = vmul.f32 %v660, 0.0625
  %v689 = vmul.f32 %v661, 0.0625
  %v690 = vmul.f32 %v662, 0.0625
  %v691 = vmul.f32 %v663, 0.0625
  %v692 = vmul.f32 %v664, 0.0625
  %v693 = vmul.f32 %v665, 0.0625
  %v694 = vmul.f32 %v666, 0.0625
  %v695 = vmul.f32 %v667, 0.0625
  %v696 = vmul.f32 %v668, 0.0625
  %v697 = vmul.f32 %v669, 0.0625
  %v698 = vmul.f32 %v670, 0.0625
  %v699 = vmul.f32 %v671, 0.0625
  %v700 = vmul.f32 %v672, 0.0625
  %v701 = vmul.f32 %v673, 0.0625
  %s702 = scalar_lea.vmem %s1, 16
  %703 = vst.msk [vmem:[%s702] sm:$0xff] %vm362, %v674
  %704 = vst.msk [vmem:[%s702 + $0x8] sm:$0xff] %vm362, %v675
  %705 = vst.msk [vmem:[%s702 + $0x10] sm:$0xff] %vm362, %v676
  %706 = vst.msk [vmem:[%s702 + $0x18] sm:$0xff] %vm362, %v677
  %707 = vst.msk [vmem:[%s702 + $0x20] sm:$0xff] %vm362, %v678
  %708 = vst.msk [vmem:[%s702 + $0x28] sm:$0xff] %vm362, %v679
  %709 = vst.msk [vmem:[%s702 + $0x30] sm:$0xff] %vm362, %v680
  %710 = vst.msk [vmem:[%s702 + $0x38] sm:$0xff] %vm362, %v681
  %711 = vst.msk [vmem:[%s702 + $0x40] sm:$0xff] %vm362, %v682
  %712 = vst.msk [vmem:[%s702 + $0x48] sm:$0xff] %vm362, %v683
  %713 = vst.msk [vmem:[%s702 + $0x50] sm:$0xff] %vm362, %v684
  %714 = vst.msk [vmem:[%s702 + $0x58] sm:$0xff] %vm362, %v685
  %715 = vst.msk [vmem:[%s702 + $0x60] sm:$0xff] %vm362, %v686
  %716 = vst.msk [vmem:[%s702 + $0x68] sm:$0xff] %vm362, %v687
  %717 = vst.msk [vmem:[%s702 + $0x70] sm:$0xff] %vm362, %v688
  %718 = vst.msk [vmem:[%s702 + $0x78] sm:$0xff] %vm362, %v689
  %719 = vst.msk [vmem:[%s702 + $0x80] sm:$0xff] %vm362, %v690
  %720 = vst.msk [vmem:[%s702 + $0x88] sm:$0xff] %vm362, %v691
  %721 = vst.msk [vmem:[%s702 + $0x90] sm:$0xff] %vm362, %v692
  %722 = vst.msk [vmem:[%s702 + $0x98] sm:$0xff] %vm362, %v693
  %723 = vst.msk [vmem:[%s702 + $0xa0] sm:$0xff] %vm362, %v694
  %724 = vst.msk [vmem:[%s702 + $0xa8] sm:$0xff] %vm362, %v695
  %725 = vst.msk [vmem:[%s702 + $0xb0] sm:$0xff] %vm362, %v696
  %726 = vst.msk [vmem:[%s702 + $0xb8] sm:$0xff] %vm362, %v697
  %727 = vst.msk [vmem:[%s702 + $0xc0] sm:$0xff] %vm362, %v698
  %728 = vst.msk [vmem:[%s702 + $0xc8] sm:$0xff] %vm362, %v699
  %729 = vst.msk [vmem:[%s702 + $0xd0] sm:$0xff] %vm362, %v700
  %730 = vst.msk [vmem:[%s702 + $0xd8] sm:$0xff] %vm362, %v701
  %v731 = vadd.f32 %v558, %v560
  %v732 = vadd.f32 %v559, %v561
  %v733 = vmul.f32 %v731, 0.125
  %v734 = vmul.f32 %v732, 0.125
  %735 = vst.msk [vmem:[%s1] sm:$0xff] %vm362, %v733
  %736 = vst.msk [vmem:[%s1 + $0x8] sm:$0xff] %vm362, %v734
  %v737 = vadd.f32 %v588, %v586
  %v738 = vadd.f32 %v589, %v587
  %v739 = vmul.f32 %v737, 0.125
  %v740 = vmul.f32 %v738, 0.125
  %s741 = scalar_lea.vmem %s1, 240
  %742 = vst.msk [vmem:[%s741] sm:$0xff] %vm362, %v739
  %743 = vst.msk [vmem:[%s741 + $0x8] sm:$0xff] %vm362, %v740
  // Predicated region
  $region6: #{tpu_custom_call.1} parent=0 // pred_check
    _
  $region7: #{tpu_custom_call.1} parent=0 // pred_check_branch
    %745 = sbr.rel (0) target = $region9
  $region8: #{tpu_custom_call.1} parent=0 // pred_region
    _
  $region9: #{tpu_custom_call.1} parent=0 // pred_fallthru
    _
  // Predicated region
  $region10: #{tpu_custom_call.1} parent=0 // pred_check
    _
  $region11: #{tpu_custom_call.1} parent=0 // pred_check_branch
    %747 = sbr.rel (0) target = $region13
  $region12: #{tpu_custom_call.1} parent=0 // pred_region
    _
  $region13: #{tpu_custom_call.1} parent=0 // pred_fallthru
    _

</llo_original>
